<compile_context>
chip_gen: v5e
topology: v5e:2x2
jax: 0.10.0
libtpu: 0.0.40
codegen_flags: <defaults>
</compile_context>

<pallas_src>
import functools
import math

import jax
import jax.numpy as jnp
from jax.experimental import pallas as pl
from jax.experimental.pallas import tpu as pltpu

# ---- config (small synthetic sizes implied by the module) ----
BATCH = 2
SEQ = 8
N_EMBD = 32
N_HEAD = 4
HEAD_DIM = N_EMBD // N_HEAD
USE_RELU_SQUARE = False          # config.use_relu_square (relu^2 frees the EUP on v5e)
DROPOUT = 0.0                    # p=0 / eval -> dropout is identity
EPS = 1.1920929e-07              # torch.finfo(float32).eps (F.rms_norm default)
MASK_VALUE = -1e30               # large finite negative (safer than -inf)
_SQRT_2_OVER_PI = math.sqrt(2.0 / math.pi)


def _rms_norm(x):
    ms = jnp.mean(x * x, axis=-1, keepdims=True)
    return x * jax.lax.rsqrt(ms + EPS)


def _gelu_tanh(x):
    return 0.5 * x * (1.0 + jnp.tanh(_SQRT_2_OVER_PI * (x + 0.044715 * x * x * x)))


def block_kernel(x_ref, wqkv_ref, bqkv_ref, wo_ref, bo_ref,
                 wfc_ref, bfc_ref, wpr_ref, bpr_ref, o_ref,
                 *, batch, seq_len, n_head, head_dim, use_relu_square):
    B, T, H, D = batch, seq_len, n_head, head_dim
    x = x_ref[...].astype(jnp.float32)            # (R, C) with R = B*T folded rows
    R, C = x.shape
    scale = 1.0 / math.sqrt(D)

    # ---------------- attention branch ----------------
    n1 = _rms_norm(x).astype(jnp.bfloat16)        # bf16 MXU operands, f32 accumulate

    # (1) fused QKV projection: single wide MXU dot, columns = [q | k | v].
    qkv = jnp.dot(n1, wqkv_ref[...],
                  preferred_element_type=jnp.float32) + bqkv_ref[...]   # (R, 3C) f32

    # (2) form q/k/v once as (B*H, T, D): static 2-D slices stacked on a new
    # leading (batch*head) axis.  n = b*H + h.
    def split_heads(off):
        parts = [qkv[b * T:(b + 1) * T, off + h * D: off + (h + 1) * D]
                 for b in range(B) for h in range(H)]
        return jnp.stack(parts, axis=0).astype(jnp.bfloat16)            # (B*H, T, D)

    q = split_heads(0)
    k = split_heads(C)
    v = split_heads(2 * C)

    # (3) scores + softmax batched over (batch, head); plain causal (T, T)
    # mask -> no block-diagonal waste from the folded batch.
    s = jnp.einsum('nqd,nkd->nqk', q, k,
                   preferred_element_type=jnp.float32) * scale          # (B*H, T, T)
    row = jax.lax.broadcasted_iota(jnp.int32, (T, T), 0)
    col = jax.lax.broadcasted_iota(jnp.int32, (T, T), 1)
    causal = (row >= col)[None, :, :]
    s = jnp.where(causal, s, MASK_VALUE)
    s = s - jnp.max(s, axis=-1, keepdims=True)
    p = jnp.exp(s)
    p = p * pl.reciprocal(jnp.sum(p, axis=-1, keepdims=True), approx=True)

    y = jnp.einsum('nqk,nkd->nqd', p.astype(jnp.bfloat16), v,
                   preferred_element_type=jnp.float32)                  # (B*H, T, D)

    # (4) reassemble (B*H, T, D) -> (R, C) (tiny lane/sublane concats) and do a
    # single (R,C)@(C,C) output-projection dot.
    y_rows = [jnp.concatenate([y[b * H + h] for h in range(H)], axis=-1)  # (T, C)
              for b in range(B)]
    y_flat = jnp.concatenate(y_rows, axis=0).astype(jnp.bfloat16)         # (R, C)
    attn = jnp.dot(y_flat, wo_ref[...],
                   preferred_element_type=jnp.float32) + bo_ref[...]
    x = x + attn                                  # dropout(p=0) == identity

    # ---------------- MLP branch ----------------
    n2 = _rms_norm(x).astype(jnp.bfloat16)
    hdn = jnp.dot(n2, wfc_ref[...], preferred_element_type=jnp.float32) + bfc_ref[...]
    if use_relu_square:
        hdn = jnp.square(jnp.maximum(hdn, 0.0))
    else:
        hdn = _gelu_tanh(hdn)
    mlp = jnp.dot(hdn.astype(jnp.bfloat16), wpr_ref[...],
                  preferred_element_type=jnp.float32) + bpr_ref[...]
    x = x + mlp                                   # dropout(p=0) == identity

    o_ref[...] = x.astype(o_ref.dtype)


def block_forward(x, params, *, n_head=N_HEAD):
    B, T, C = x.shape
    D = C // n_head
    (wqkv, bqkv, wo, bo, wfc, bfc, wpr, bpr) = params
    R = B * T

    x2 = x.reshape(R, C)                          # wrapper-side layout plumbing

    # Single-buffered resident weights: whole array pinned in VMEM, no pipeline
    # double-buffering (constant operands never need a second buffer).
    def resident():
        return pl.BlockSpec(memory_space=pltpu.MemorySpace.VMEM)

    weights = (wqkv, bqkv, wo, bo, wfc, bfc, wpr, bpr)
    weight_bytes = sum(int(w.size) * w.dtype.itemsize for w in weights)

    # Cost estimate (per-batch scores, not block-diagonal-folded).
    flops = (2 * R * C * (3 * C)                  # fused QKV
             + 4 * B * n_head * T * T * D         # scores + P@V
             + 2 * R * C * C                      # out projection
             + 2 * R * C * 4 * C * 2)             # MLP
    transcendentals = B * n_head * T * T + R * 4 * C + 2 * R + B * n_head * T
    bytes_accessed = 2 * int(x2.size) * x2.dtype.itemsize + weight_bytes

    # Explicit VMEM budget: resident weights + activation working set, with
    # generous headroom (clamped well under every generation's scoped limit).
    act_bytes = 8 * int(x2.size) * 4 + 4 * R * 4 * C * 4
    vmem_limit = int(min(64 * 2 ** 20, max(8 * 2 ** 20, 4 * (weight_bytes + act_bytes))))

    kernel = functools.partial(
        block_kernel, batch=B, seq_len=T, n_head=n_head, head_dim=D,
        use_relu_square=USE_RELU_SQUARE)

    out2 = pl.pallas_call(
        kernel,
        out_shape=jax.ShapeDtypeStruct((R, C), x.dtype),
        grid=(1,),                                # single folded step (toy dims)
        in_specs=[pl.BlockSpec((R, C), lambda i: (0, 0))]
                 + [resident() for _ in weights],
        out_specs=pl.BlockSpec((R, C), lambda i: (0, 0)),
        compiler_params=pltpu.CompilerParams(
            dimension_semantics=("arbitrary",),
            vmem_limit_bytes=vmem_limit),
        cost_estimate=pl.CostEstimate(flops=flops,
                                      transcendentals=transcendentals,
                                      bytes_accessed=bytes_accessed),
    )(x2, *weights)
    return out2.reshape(B, T, C)


# ---------------- parameter handling (PyTorch layout -> kernel layout) ----------------

def init_torch_style_params(key):
    """Weights in PyTorch nn.Linear layout: (out_features, in_features)."""
    ks = jax.random.split(key, 8)
    std = 0.02
    w_attn = jax.random.normal(ks[0], (3 * N_EMBD, N_EMBD), jnp.float32) * std  # c_attn
    b_attn = jax.random.normal(ks[1], (3 * N_EMBD,), jnp.float32) * std
    w_proj = jax.random.normal(ks[2], (N_EMBD, N_EMBD), jnp.float32) * std      # attn c_proj
    b_proj = jax.random.normal(ks[3], (N_EMBD,), jnp.float32) * std
    w_fc = jax.random.normal(ks[4], (4 * N_EMBD, N_EMBD), jnp.float32) * std    # mlp.c_fc
    b_fc = jax.random.normal(ks[5], (4 * N_EMBD,), jnp.float32) * std
    w_pr = jax.random.normal(ks[6], (N_EMBD, 4 * N_EMBD), jnp.float32) * std    # mlp.c_proj
    b_pr = jax.random.normal(ks[7], (N_EMBD,), jnp.float32) * std
    return (w_attn, b_attn, w_proj, b_proj, w_fc, b_fc, w_pr, b_pr)


def prepare_params(torch_params):
    """Pre-concatenate QKV (fused dot) and transpose to x @ W layout (bf16 MXU)."""
    (w_attn, b_attn, w_proj, b_proj, w_fc, b_fc, w_pr, b_pr) = torch_params
    C = w_attn.shape[1]
    wqkv = w_attn.T.astype(jnp.bfloat16)                  # (C, 3C), columns [q | k | v]
    bqkv = b_attn.reshape(1, 3 * C).astype(jnp.float32)
    wo = w_proj.T.astype(jnp.bfloat16)                    # (C, C)
    bo = b_proj.reshape(1, C).astype(jnp.float32)
    wfc = w_fc.T.astype(jnp.bfloat16)                     # (C, 4C)
    bfc = b_fc.reshape(1, 4 * C).astype(jnp.float32)
    wpr = w_pr.T.astype(jnp.bfloat16)                     # (4C, C)
    bpr = b_pr.reshape(1, C).astype(jnp.float32)
    return (wqkv, bqkv, wo, bo, wfc, bfc, wpr, bpr)


# ---------------- pure-JAX reference (f32) ----------------

def block_reference(x, torch_params):
    (w_attn, b_attn, w_proj, b_proj, w_fc, b_fc, w_pr, b_pr) = torch_params
    B, T, C = x.shape
    H, D = N_HEAD, HEAD_DIM
    n1 = _rms_norm(x)
    qkv = n1 @ w_attn.T + b_attn
    q, k, v = jnp.split(qkv, 3, axis=-1)
    q = q.reshape(B, T, H, D).transpose(0, 2, 1, 3)
    k = k.reshape(B, T, H, D).transpose(0, 2, 1, 3)
    v = v.reshape(B, T, H, D).transpose(0, 2, 1, 3)
    s = (q @ jnp.swapaxes(k, -1, -2)) / math.sqrt(D)
    causal = jnp.tril(jnp.ones((T, T), dtype=bool))
    s = jnp.where(causal, s, -jnp.inf)
    p = jax.nn.softmax(s, axis=-1)
    y = (p @ v).transpose(0, 2, 1, 3).reshape(B, T, C)
    x = x + (y @ w_proj.T + b_proj)
    n2 = _rms_norm(x)
    h = n2 @ w_fc.T + b_fc
    h = jnp.square(jnp.maximum(h, 0.0)) if USE_RELU_SQUARE else _gelu_tanh(h)
    x = x + (h @ w_pr.T + b_pr)
    return x


if __name__ == "__main__":
    key = jax.random.PRNGKey(0)
    kx, kp = jax.random.split(key)
    x = jax.random.normal(kx, (BATCH, SEQ, N_EMBD), jnp.float32)
    torch_params = init_torch_style_params(kp)
    params = prepare_params(torch_params)

    out = block_forward(x, params)
    out = jax.block_until_ready(out)
    assert out.shape == (BATCH, SEQ, N_EMBD)
    assert bool(jnp.all(jnp.isfinite(out)))

    # Loose tolerance: kernel uses bf16 MXU operands + approx reciprocal.
    ref = block_reference(x, torch_params)
    err = float(jnp.max(jnp.abs(out - ref)))
    assert err < 3e-2, f"max abs err {err}"

    print("KERNEL_OK")
</pallas_src>

<mosaic_0001>
module attributes {stable_mosaic.version = 11 : i64} {
  func.func @block_kernel(%arg0: i32, %arg1: memref<16x32xf32, #tpu.memory_space<vmem>>, %arg2: memref<32x96xbf16, #tpu.memory_space<vmem>>, %arg3: memref<1x96xf32, #tpu.memory_space<vmem>>, %arg4: memref<32x32xbf16, #tpu.memory_space<vmem>>, %arg5: memref<1x32xf32, #tpu.memory_space<vmem>>, %arg6: memref<32x128xbf16, #tpu.memory_space<vmem>>, %arg7: memref<1x128xf32, #tpu.memory_space<vmem>>, %arg8: memref<128x32xbf16, #tpu.memory_space<vmem>>, %arg9: memref<1x32xf32, #tpu.memory_space<vmem>>, %arg10: memref<16x32xf32, #tpu.memory_space<vmem>>) attributes {dimension_semantics = [#tpu.dimension_semantics<arbitrary>], iteration_bounds = array<i64: 1>, scalar_prefetch = 0 : i64, scratch_operands = 0 : i64, tpu.core_type = #tpu.core_type<tc>, window_params = [{pipeline_mode = #tpu.pipeline_mode<synchronous>, transform_indices = @transform_0, window_bounds = array<i64: 16, 32>}, {pipeline_mode = #tpu.pipeline_mode<synchronous>, transform_indices = @transform_1, window_bounds = array<i64: 32, 96>}, {pipeline_mode = #tpu.pipeline_mode<synchronous>, transform_indices = @transform_2, window_bounds = array<i64: 1, 96>}, {pipeline_mode = #tpu.pipeline_mode<synchronous>, transform_indices = @transform_3, window_bounds = array<i64: 32, 32>}, {pipeline_mode = #tpu.pipeline_mode<synchronous>, transform_indices = @transform_4, window_bounds = array<i64: 1, 32>}, {pipeline_mode = #tpu.pipeline_mode<synchronous>, transform_indices = @transform_5, window_bounds = array<i64: 32, 128>}, {pipeline_mode = #tpu.pipeline_mode<synchronous>, transform_indices = @transform_6, window_bounds = array<i64: 1, 128>}, {pipeline_mode = #tpu.pipeline_mode<synchronous>, transform_indices = @transform_7, window_bounds = array<i64: 128, 32>}, {pipeline_mode = #tpu.pipeline_mode<synchronous>, transform_indices = @transform_8, window_bounds = array<i64: 1, 32>}, {pipeline_mode = #tpu.pipeline_mode<synchronous>, transform_indices = @transform_9, window_bounds = array<i64: 16, 32>}]} {
    %c0 = arith.constant 0 : index
    %c0_0 = arith.constant 0 : index
    %0 = vector.load %arg1[%c0, %c0_0] : memref<16x32xf32, #tpu.memory_space<vmem>>, vector<16x32xf32>
    %1 = arith.mulf %0, %0 : vector<16x32xf32>
    %cst = arith.constant dense<0.000000e+00> : vector<16xf32>
    %2 = vector.multi_reduction <add>, %1, %cst [1] : vector<16x32xf32> to vector<16xf32>
    %3 = vector.shape_cast %2 : vector<16xf32> to vector<16x1xf32>
    %cst_1 = arith.constant 3.200000e+01 : f32
    %4 = vector.broadcast %cst_1 : f32 to vector<16x1xf32>
    %5 = arith.divf %3, %4 : vector<16x1xf32>
    %cst_2 = arith.constant 1.1920929E-7 : f32
    %6 = vector.broadcast %cst_2 : f32 to vector<16x1xf32>
    %7 = arith.addf %5, %6 : vector<16x1xf32>
    %8 = math.rsqrt %7 : vector<16x1xf32>
    %9 = vector.broadcast %8 : vector<16x1xf32> to vector<16x32xf32>
    %10 = arith.mulf %0, %9 : vector<16x32xf32>
    %11 = arith.truncf %10 : vector<16x32xf32> to vector<16x32xbf16>
    %c0_3 = arith.constant 0 : index
    %c0_4 = arith.constant 0 : index
    %12 = vector.load %arg2[%c0_3, %c0_4] : memref<32x96xbf16, #tpu.memory_space<vmem>>, vector<32x96xbf16>
    %cst_5 = arith.constant dense<0.000000e+00> : vector<16x96xf32>
    %13 = tpu.matmul %11, %12, %cst_5 {dimension_numbers = #tpu.dot_dimension_numbers<[1], [0], [0], [1], [0, 0, 1, 1], [], []>} : vector<16x32xbf16>, vector<32x96xbf16>, vector<16x96xf32> -> vector<16x96xf32>
    %c0_6 = arith.constant 0 : index
    %c0_7 = arith.constant 0 : index
    %14 = vector.load %arg3[%c0_6, %c0_7] : memref<1x96xf32, #tpu.memory_space<vmem>>, vector<1x96xf32>
    %15 = vector.broadcast %14 : vector<1x96xf32> to vector<16x96xf32>
    %16 = arith.addf %13, %15 : vector<16x96xf32>
    %17 = vector.extract_strided_slice %16 {offsets = [0, 0], sizes = [8, 8], strides = [1, 1]} : vector<16x96xf32> to vector<8x8xf32>
    %18 = vector.extract_strided_slice %16 {offsets = [0, 8], sizes = [8, 8], strides = [1, 1]} : vector<16x96xf32> to vector<8x8xf32>
    %19 = vector.extract_strided_slice %16 {offsets = [0, 16], sizes = [8, 8], strides = [1, 1]} : vector<16x96xf32> to vector<8x8xf32>
    %20 = vector.extract_strided_slice %16 {offsets = [0, 24], sizes = [8, 8], strides = [1, 1]} : vector<16x96xf32> to vector<8x8xf32>
    %21 = vector.extract_strided_slice %16 {offsets = [8, 0], sizes = [8, 8], strides = [1, 1]} : vector<16x96xf32> to vector<8x8xf32>
    %22 = vector.extract_strided_slice %16 {offsets = [8, 8], sizes = [8, 8], strides = [1, 1]} : vector<16x96xf32> to vector<8x8xf32>
    %23 = vector.extract_strided_slice %16 {offsets = [8, 16], sizes = [8, 8], strides = [1, 1]} : vector<16x96xf32> to vector<8x8xf32>
    %24 = vector.extract_strided_slice %16 {offsets = [8, 24], sizes = [8, 8], strides = [1, 1]} : vector<16x96xf32> to vector<8x8xf32>
    %25 = vector.shape_cast %17 : vector<8x8xf32> to vector<1x8x8xf32>
    %26 = vector.shape_cast %18 : vector<8x8xf32> to vector<1x8x8xf32>
    %27 = vector.shape_cast %19 : vector<8x8xf32> to vector<1x8x8xf32>
    %28 = vector.shape_cast %20 : vector<8x8xf32> to vector<1x8x8xf32>
    %29 = vector.shape_cast %21 : vector<8x8xf32> to vector<1x8x8xf32>
    %30 = vector.shape_cast %22 : vector<8x8xf32> to vector<1x8x8xf32>
    %31 = vector.shape_cast %23 : vector<8x8xf32> to vector<1x8x8xf32>
    %32 = vector.shape_cast %24 : vector<8x8xf32> to vector<1x8x8xf32>
    %33 = tpu.concatenate %25, %26, %27, %28, %29, %30, %31, %32 in 0 : vector<1x8x8xf32>, vector<1x8x8xf32>, vector<1x8x8xf32>, vector<1x8x8xf32>, vector<1x8x8xf32>, vector<1x8x8xf32>, vector<1x8x8xf32>, vector<1x8x8xf32> -> vector<8x8x8xf32>
    %34 = arith.truncf %33 : vector<8x8x8xf32> to vector<8x8x8xbf16>
    %35 = vector.extract_strided_slice %16 {offsets = [0, 32], sizes = [8, 8], strides = [1, 1]} : vector<16x96xf32> to vector<8x8xf32>
    %36 = vector.extract_strided_slice %16 {offsets = [0, 40], sizes = [8, 8], strides = [1, 1]} : vector<16x96xf32> to vector<8x8xf32>
    %37 = vector.extract_strided_slice %16 {offsets = [0, 48], sizes = [8, 8], strides = [1, 1]} : vector<16x96xf32> to vector<8x8xf32>
    %38 = vector.extract_strided_slice %16 {offsets = [0, 56], sizes = [8, 8], strides = [1, 1]} : vector<16x96xf32> to vector<8x8xf32>
    %39 = vector.extract_strided_slice %16 {offsets = [8, 32], sizes = [8, 8], strides = [1, 1]} : vector<16x96xf32> to vector<8x8xf32>
    %40 = vector.extract_strided_slice %16 {offsets = [8, 40], sizes = [8, 8], strides = [1, 1]} : vector<16x96xf32> to vector<8x8xf32>
    %41 = vector.extract_strided_slice %16 {offsets = [8, 48], sizes = [8, 8], strides = [1, 1]} : vector<16x96xf32> to vector<8x8xf32>
    %42 = vector.extract_strided_slice %16 {offsets = [8, 56], sizes = [8, 8], strides = [1, 1]} : vector<16x96xf32> to vector<8x8xf32>
    %43 = vector.shape_cast %35 : vector<8x8xf32> to vector<1x8x8xf32>
    %44 = vector.shape_cast %36 : vector<8x8xf32> to vector<1x8x8xf32>
    %45 = vector.shape_cast %37 : vector<8x8xf32> to vector<1x8x8xf32>
    %46 = vector.shape_cast %38 : vector<8x8xf32> to vector<1x8x8xf32>
    %47 = vector.shape_cast %39 : vector<8x8xf32> to vector<1x8x8xf32>
    %48 = vector.shape_cast %40 : vector<8x8xf32> to vector<1x8x8xf32>
    %49 = vector.shape_cast %41 : vector<8x8xf32> to vector<1x8x8xf32>
    %50 = vector.shape_cast %42 : vector<8x8xf32> to vector<1x8x8xf32>
    %51 = tpu.concatenate %43, %44, %45, %46, %47, %48, %49, %50 in 0 : vector<1x8x8xf32>, vector<1x8x8xf32>, vector<1x8x8xf32>, vector<1x8x8xf32>, vector<1x8x8xf32>, vector<1x8x8xf32>, vector<1x8x8xf32>, vector<1x8x8xf32> -> vector<8x8x8xf32>
    %52 = arith.truncf %51 : vector<8x8x8xf32> to vector<8x8x8xbf16>
    %53 = vector.extract_strided_slice %16 {offsets = [0, 64], sizes = [8, 8], strides = [1, 1]} : vector<16x96xf32> to vector<8x8xf32>
    %54 = vector.extract_strided_slice %16 {offsets = [0, 72], sizes = [8, 8], strides = [1, 1]} : vector<16x96xf32> to vector<8x8xf32>
    %55 = vector.extract_strided_slice %16 {offsets = [0, 80], sizes = [8, 8], strides = [1, 1]} : vector<16x96xf32> to vector<8x8xf32>
    %56 = vector.extract_strided_slice %16 {offsets = [0, 88], sizes = [8, 8], strides = [1, 1]} : vector<16x96xf32> to vector<8x8xf32>
    %57 = vector.extract_strided_slice %16 {offsets = [8, 64], sizes = [8, 8], strides = [1, 1]} : vector<16x96xf32> to vector<8x8xf32>
    %58 = vector.extract_strided_slice %16 {offsets = [8, 72], sizes = [8, 8], strides = [1, 1]} : vector<16x96xf32> to vector<8x8xf32>
    %59 = vector.extract_strided_slice %16 {offsets = [8, 80], sizes = [8, 8], strides = [1, 1]} : vector<16x96xf32> to vector<8x8xf32>
    %60 = vector.extract_strided_slice %16 {offsets = [8, 88], sizes = [8, 8], strides = [1, 1]} : vector<16x96xf32> to vector<8x8xf32>
    %61 = vector.shape_cast %53 : vector<8x8xf32> to vector<1x8x8xf32>
    %62 = vector.shape_cast %54 : vector<8x8xf32> to vector<1x8x8xf32>
    %63 = vector.shape_cast %55 : vector<8x8xf32> to vector<1x8x8xf32>
    %64 = vector.shape_cast %56 : vector<8x8xf32> to vector<1x8x8xf32>
    %65 = vector.shape_cast %57 : vector<8x8xf32> to vector<1x8x8xf32>
    %66 = vector.shape_cast %58 : vector<8x8xf32> to vector<1x8x8xf32>
    %67 = vector.shape_cast %59 : vector<8x8xf32> to vector<1x8x8xf32>
    %68 = vector.shape_cast %60 : vector<8x8xf32> to vector<1x8x8xf32>
    %69 = tpu.concatenate %61, %62, %63, %64, %65, %66, %67, %68 in 0 : vector<1x8x8xf32>, vector<1x8x8xf32>, vector<1x8x8xf32>, vector<1x8x8xf32>, vector<1x8x8xf32>, vector<1x8x8xf32>, vector<1x8x8xf32>, vector<1x8x8xf32> -> vector<8x8x8xf32>
    %70 = arith.truncf %69 : vector<8x8x8xf32> to vector<8x8x8xbf16>
    "tpu.trace_start"() <{level = 10 : i32, message = "nqd,nkd->nqk"}> : () -> ()
    %cst_8 = arith.constant dense<0.000000e+00> : vector<8x8x8xf32>
    %71 = tpu.matmul %34, %52, %cst_8 {dimension_numbers = #tpu.dot_dimension_numbers<[2], [2], [1], [1], [0, 0, 0, 1, 1, 1], [0], [0]>} : vector<8x8x8xbf16>, vector<8x8x8xbf16>, vector<8x8x8xf32> -> vector<8x8x8xf32>
    "tpu.trace_stop"() : () -> ()
    %cst_9 = arith.constant 0.353553385 : f32
    %72 = vector.broadcast %cst_9 : f32 to vector<8x8x8xf32>
    %73 = arith.mulf %71, %72 : vector<8x8x8xf32>
    %74 = tpu.iota {dimensions = array<i32: 0>} : vector<8x8xi32>
    %75 = tpu.iota {dimensions = array<i32: 1>} : vector<8x8xi32>
    %76 = arith.cmpi sge, %74, %75 : vector<8x8xi32>
    %77 = vector.shape_cast %76 : vector<8x8xi1> to vector<1x8x8xi1>
    %cst_10 = arith.constant -1.000000e+30 : f32
    %78 = vector.shape_cast %77 : vector<1x8x8xi1> to vector<1x8x8xi1>
    %79 = vector.broadcast %78 : vector<1x8x8xi1> to vector<8x8x8xi1>
    %80 = vector.broadcast %cst_10 : f32 to vector<8x8x8xf32>
    %81 = arith.select %79, %73, %80 : vector<8x8x8xi1>, vector<8x8x8xf32>
    %cst_11 = arith.constant dense<0xFF800000> : vector<8x8xf32>
    %82 = vector.multi_reduction <maximumf>, %81, %cst_11 [2] : vector<8x8x8xf32> to vector<8x8xf32>
    %83 = vector.shape_cast %82 : vector<8x8xf32> to vector<8x8x1xf32>
    %84 = vector.broadcast %83 : vector<8x8x1xf32> to vector<8x8x8xf32>
    %85 = arith.subf %81, %84 : vector<8x8x8xf32>
    %86 = math.exp %85 : vector<8x8x8xf32>
    %cst_12 = arith.constant dense<0.000000e+00> : vector<8x8xf32>
    %87 = vector.multi_reduction <add>, %86, %cst_12 [2] : vector<8x8x8xf32> to vector<8x8xf32>
    %88 = vector.shape_cast %87 : vector<8x8xf32> to vector<8x8x1xf32>
    %89 = tpu.reciprocal %88 {approx = true} : vector<8x8x1xf32> -> vector<8x8x1xf32>
    %90 = vector.broadcast %89 : vector<8x8x1xf32> to vector<8x8x8xf32>
    %91 = arith.mulf %86, %90 : vector<8x8x8xf32>
    %92 = arith.truncf %91 : vector<8x8x8xf32> to vector<8x8x8xbf16>
    "tpu.trace_start"() <{level = 10 : i32, message = "nqk,nkd->nqd"}> : () -> ()
    %cst_13 = arith.constant dense<0.000000e+00> : vector<8x8x8xf32>
    %93 = tpu.matmul %92, %70, %cst_13 {dimension_numbers = #tpu.dot_dimension_numbers<[2], [1], [1], [2], [0, 0, 0, 1, 1, 2], [0], [0]>} : vector<8x8x8xbf16>, vector<8x8x8xbf16>, vector<8x8x8xf32> -> vector<8x8x8xf32>
    "tpu.trace_stop"() : () -> ()
    %94 = vector.extract_strided_slice %93 {offsets = [0, 0, 0], sizes = [1, 8, 8], strides = [1, 1, 1]} : vector<8x8x8xf32> to vector<1x8x8xf32>
    %95 = vector.shape_cast %94 : vector<1x8x8xf32> to vector<8x8xf32>
    %96 = vector.extract_strided_slice %93 {offsets = [1, 0, 0], sizes = [1, 8, 8], strides = [1, 1, 1]} : vector<8x8x8xf32> to vector<1x8x8xf32>
    %97 = vector.shape_cast %96 : vector<1x8x8xf32> to vector<8x8xf32>
    %98 = vector.extract_strided_slice %93 {offsets = [2, 0, 0], sizes = [1, 8, 8], strides = [1, 1, 1]} : vector<8x8x8xf32> to vector<1x8x8xf32>
    %99 = vector.shape_cast %98 : vector<1x8x8xf32> to vector<8x8xf32>
    %100 = vector.extract_strided_slice %93 {offsets = [3, 0, 0], sizes = [1, 8, 8], strides = [1, 1, 1]} : vector<8x8x8xf32> to vector<1x8x8xf32>
    %101 = vector.shape_cast %100 : vector<1x8x8xf32> to vector<8x8xf32>
    %102 = tpu.concatenate %95, %97, %99, %101 in 1 : vector<8x8xf32>, vector<8x8xf32>, vector<8x8xf32>, vector<8x8xf32> -> vector<8x32xf32>
    %103 = vector.extract_strided_slice %93 {offsets = [4, 0, 0], sizes = [1, 8, 8], strides = [1, 1, 1]} : vector<8x8x8xf32> to vector<1x8x8xf32>
    %104 = vector.shape_cast %103 : vector<1x8x8xf32> to vector<8x8xf32>
    %105 = vector.extract_strided_slice %93 {offsets = [5, 0, 0], sizes = [1, 8, 8], strides = [1, 1, 1]} : vector<8x8x8xf32> to vector<1x8x8xf32>
    %106 = vector.shape_cast %105 : vector<1x8x8xf32> to vector<8x8xf32>
    %107 = vector.extract_strided_slice %93 {offsets = [6, 0, 0], sizes = [1, 8, 8], strides = [1, 1, 1]} : vector<8x8x8xf32> to vector<1x8x8xf32>
    %108 = vector.shape_cast %107 : vector<1x8x8xf32> to vector<8x8xf32>
    %109 = vector.extract_strided_slice %93 {offsets = [7, 0, 0], sizes = [1, 8, 8], strides = [1, 1, 1]} : vector<8x8x8xf32> to vector<1x8x8xf32>
    %110 = vector.shape_cast %109 : vector<1x8x8xf32> to vector<8x8xf32>
    %111 = tpu.concatenate %104, %106, %108, %110 in 1 : vector<8x8xf32>, vector<8x8xf32>, vector<8x8xf32>, vector<8x8xf32> -> vector<8x32xf32>
    %112 = tpu.concatenate %102, %111 in 0 : vector<8x32xf32>, vector<8x32xf32> -> vector<16x32xf32>
    %113 = arith.truncf %112 : vector<16x32xf32> to vector<16x32xbf16>
    %c0_14 = arith.constant 0 : index
    %c0_15 = arith.constant 0 : index
    %114 = vector.load %arg4[%c0_14, %c0_15] : memref<32x32xbf16, #tpu.memory_space<vmem>>, vector<32x32xbf16>
    %cst_16 = arith.constant dense<0.000000e+00> : vector<16x32xf32>
    %115 = tpu.matmul %113, %114, %cst_16 {dimension_numbers = #tpu.dot_dimension_numbers<[1], [0], [0], [1], [0, 0, 1, 1], [], []>} : vector<16x32xbf16>, vector<32x32xbf16>, vector<16x32xf32> -> vector<16x32xf32>
    %c0_17 = arith.constant 0 : index
    %c0_18 = arith.constant 0 : index
    %116 = vector.load %arg5[%c0_17, %c0_18] : memref<1x32xf32, #tpu.memory_space<vmem>>, vector<1x32xf32>
    %117 = vector.broadcast %116 : vector<1x32xf32> to vector<16x32xf32>
    %118 = arith.addf %115, %117 : vector<16x32xf32>
    %119 = arith.addf %0, %118 : vector<16x32xf32>
    %120 = arith.mulf %119, %119 : vector<16x32xf32>
    %cst_19 = arith.constant dense<0.000000e+00> : vector<16xf32>
    %121 = vector.multi_reduction <add>, %120, %cst_19 [1] : vector<16x32xf32> to vector<16xf32>
    %122 = vector.shape_cast %121 : vector<16xf32> to vector<16x1xf32>
    %cst_20 = arith.constant 3.200000e+01 : f32
    %123 = vector.broadcast %cst_20 : f32 to vector<16x1xf32>
    %124 = arith.divf %122, %123 : vector<16x1xf32>
    %cst_21 = arith.constant 1.1920929E-7 : f32
    %125 = vector.broadcast %cst_21 : f32 to vector<16x1xf32>
    %126 = arith.addf %124, %125 : vector<16x1xf32>
    %127 = math.rsqrt %126 : vector<16x1xf32>
    %128 = vector.broadcast %127 : vector<16x1xf32> to vector<16x32xf32>
    %129 = arith.mulf %119, %128 : vector<16x32xf32>
    %130 = arith.truncf %129 : vector<16x32xf32> to vector<16x32xbf16>
    %c0_22 = arith.constant 0 : index
    %c0_23 = arith.constant 0 : index
    %131 = vector.load %arg6[%c0_22, %c0_23] : memref<32x128xbf16, #tpu.memory_space<vmem>>, vector<32x128xbf16>
    %cst_24 = arith.constant dense<0.000000e+00> : vector<16x128xf32>
    %132 = tpu.matmul %130, %131, %cst_24 {dimension_numbers = #tpu.dot_dimension_numbers<[1], [0], [0], [1], [0, 0, 1, 1], [], []>} : vector<16x32xbf16>, vector<32x128xbf16>, vector<16x128xf32> -> vector<16x128xf32>
    %c0_25 = arith.constant 0 : index
    %c0_26 = arith.constant 0 : index
    %133 = vector.load %arg7[%c0_25, %c0_26] : memref<1x128xf32, #tpu.memory_space<vmem>>, vector<1x128xf32>
    %134 = vector.broadcast %133 : vector<1x128xf32> to vector<16x128xf32>
    %135 = arith.addf %132, %134 : vector<16x128xf32>
    %cst_27 = arith.constant 5.000000e-01 : f32
    %136 = vector.broadcast %cst_27 : f32 to vector<16x128xf32>
    %137 = arith.mulf %136, %135 : vector<16x128xf32>
    %cst_28 = arith.constant 4.471500e-02 : f32
    %138 = vector.broadcast %cst_28 : f32 to vector<16x128xf32>
    %139 = arith.mulf %138, %135 : vector<16x128xf32>
    %140 = arith.mulf %139, %135 : vector<16x128xf32>
    %141 = arith.mulf %140, %135 : vector<16x128xf32>
    %142 = arith.addf %135, %141 : vector<16x128xf32>
    %cst_29 = arith.constant 0.797884583 : f32
    %143 = vector.broadcast %cst_29 : f32 to vector<16x128xf32>
    %144 = arith.mulf %143, %142 : vector<16x128xf32>
    %145 = math.tanh %144 : vector<16x128xf32>
    %cst_30 = arith.constant 1.000000e+00 : f32
    %146 = vector.broadcast %cst_30 : f32 to vector<16x128xf32>
    %147 = arith.addf %146, %145 : vector<16x128xf32>
    %148 = arith.mulf %137, %147 : vector<16x128xf32>
    %149 = arith.truncf %148 : vector<16x128xf32> to vector<16x128xbf16>
    %c0_31 = arith.constant 0 : index
    %c0_32 = arith.constant 0 : index
    %150 = vector.load %arg8[%c0_31, %c0_32] : memref<128x32xbf16, #tpu.memory_space<vmem>>, vector<128x32xbf16>
    %cst_33 = arith.constant dense<0.000000e+00> : vector<16x32xf32>
    %151 = tpu.matmul %149, %150, %cst_33 {dimension_numbers = #tpu.dot_dimension_numbers<[1], [0], [0], [1], [0, 0, 1, 1], [], []>} : vector<16x128xbf16>, vector<128x32xbf16>, vector<16x32xf32> -> vector<16x32xf32>
    %c0_34 = arith.constant 0 : index
    %c0_35 = arith.constant 0 : index
    %152 = vector.load %arg9[%c0_34, %c0_35] : memref<1x32xf32, #tpu.memory_space<vmem>>, vector<1x32xf32>
    %153 = vector.broadcast %152 : vector<1x32xf32> to vector<16x32xf32>
    %154 = arith.addf %151, %153 : vector<16x32xf32>
    %155 = arith.addf %119, %154 : vector<16x32xf32>
    %c0_36 = arith.constant 0 : index
    %c0_37 = arith.constant 0 : index
    %156 = vector.load %arg10[%c0_36, %c0_37] : memref<16x32xf32, #tpu.memory_space<vmem>>, vector<16x32xf32>
    tpu.vector_store %arg10[%c0_36, %c0_37], %155 {strides = array<i32>} : memref<16x32xf32, #tpu.memory_space<vmem>>, vector<16x32xf32>,
    return
  }
  func.func @transform_0(%arg0: i32) -> (i32, i32) {
    %c0_i32 = arith.constant 0 : i32
    %c0_i32_0 = arith.constant 0 : i32
    %c0_i32_1 = arith.constant 0 : i32
    return %c0_i32, %c0_i32_0 : i32, i32
  }
  func.func @transform_1(%arg0: i32) -> (i32, i32) {
    %c0_i32 = arith.constant 0 : i32
    %c0_i32_0 = arith.constant 0 : i32
    %c0_i32_1 = arith.constant 0 : i32
    return %c0_i32, %c0_i32_0 : i32, i32
  }
  func.func @transform_2(%arg0: i32) -> (i32, i32) {
    %c0_i32 = arith.constant 0 : i32
    %c0_i32_0 = arith.constant 0 : i32
    %c0_i32_1 = arith.constant 0 : i32
    return %c0_i32, %c0_i32_0 : i32, i32
  }
  func.func @transform_3(%arg0: i32) -> (i32, i32) {
    %c0_i32 = arith.constant 0 : i32
    %c0_i32_0 = arith.constant 0 : i32
    %c0_i32_1 = arith.constant 0 : i32
    return %c0_i32, %c0_i32_0 : i32, i32
  }
  func.func @transform_4(%arg0: i32) -> (i32, i32) {
    %c0_i32 = arith.constant 0 : i32
    %c0_i32_0 = arith.constant 0 : i32
    %c0_i32_1 = arith.constant 0 : i32
    return %c0_i32, %c0_i32_0 : i32, i32
  }
  func.func @transform_5(%arg0: i32) -> (i32, i32) {
    %c0_i32 = arith.constant 0 : i32
    %c0_i32_0 = arith.constant 0 : i32
    %c0_i32_1 = arith.constant 0 : i32
    return %c0_i32, %c0_i32_0 : i32, i32
  }
  func.func @transform_6(%arg0: i32) -> (i32, i32) {
    %c0_i32 = arith.constant 0 : i32
    %c0_i32_0 = arith.constant 0 : i32
    %c0_i32_1 = arith.constant 0 : i32
    return %c0_i32, %c0_i32_0 : i32, i32
  }
  func.func @transform_7(%arg0: i32) -> (i32, i32) {
    %c0_i32 = arith.constant 0 : i32
    %c0_i32_0 = arith.constant 0 : i32
    %c0_i32_1 = arith.constant 0 : i32
    return %c0_i32, %c0_i32_0 : i32, i32
  }
  func.func @transform_8(%arg0: i32) -> (i32, i32) {
    %c0_i32 = arith.constant 0 : i32
    %c0_i32_0 = arith.constant 0 : i32
    %c0_i32_1 = arith.constant 0 : i32
    return %c0_i32, %c0_i32_0 : i32, i32
  }
  func.func @transform_9(%arg0: i32) -> (i32, i32) {
    %c0_i32 = arith.constant 0 : i32
    %c0_i32_0 = arith.constant 0 : i32
    %c0_i32_1 = arith.constant 0 : i32
    return %c0_i32, %c0_i32_0 : i32, i32
  }
}

</mosaic_0001>

<llo_original>
// kernel: tpu_custom_call.1
$region0: #{tpu_custom_call.1}
  #allocation0 [shape = 'u32[]', space=smem, size = 0x4, offset = 0x4, fixed_abs, tag = 'smem constant byte address 0x4 - core index']
  #allocation1 [shape = 'u32[72,128]{1,0:T(1,128)}', space=vmem, size = 0x9000, scoped, tag = 'internal scratch']
  %s0 = inlined_call_operand.vmem [shape: f32[16,32], index: 0, kind: input, shape index: {}]
  %s1 = inlined_call_operand.vmem [shape: bf16[32,96], index: 1, kind: input, shape index: {}]
  %s2 = inlined_call_operand.vmem [shape: f32[1,96], index: 2, kind: input, shape index: {}]
  %s3 = inlined_call_operand.vmem [shape: bf16[32,32], index: 3, kind: input, shape index: {}]
  %s4 = inlined_call_operand.vmem [shape: f32[1,32], index: 4, kind: input, shape index: {}]
  %s5 = inlined_call_operand.vmem [shape: bf16[32,128], index: 5, kind: input, shape index: {}]
  %s6 = inlined_call_operand.vmem [shape: f32[1,128], index: 6, kind: input, shape index: {}]
  %s7 = inlined_call_operand.vmem [shape: bf16[128,32], index: 7, kind: input, shape index: {}]
  %s8 = inlined_call_operand.vmem [shape: f32[1,32], index: 8, kind: input, shape index: {}]
  %s9 = inlined_call_operand.hbm [shape: f32[16,32], index: 9, kind: output, shape index: {}]
  %s10 = sld [smem:[#allocation0]]
  $region46: #{tpu_custom_call.1} parent=0
    _
  %s12 = ssub.s32 1, %s10
  %s13 = scalar_select 0, %s12, %s10
  $region1: #{tpu_custom_call.1} parent=0
    #allocation2 [shape = 'u8[8192]{0}', space=vmem, size = 0x2000, scoped, tag = 'output window, operand 0, single buffered']
    #allocation3 [shape = 's32[1]{0}', space=sflag, size = 0x4, scoped, tag = 'scoped memory for tpu_custom_call.1']
    %14 = vsyncpa [#allocation3], 0
    // Predicated region
    $region2: #{tpu_custom_call.1} parent=1 // pred_check
      _
    $region3: #{tpu_custom_call.1} parent=1 // pred_check_branch
      %16 = sbr.rel (0) target = $region5
    $region4: #{tpu_custom_call.1} parent=1 // pred_region
      _
    $region5: #{tpu_custom_call.1} parent=1 // pred_fallthru
      _
    // Predicated region
    $region6: #{tpu_custom_call.1} parent=1 // pred_check
      _
    $region7: #{tpu_custom_call.1} parent=1 // pred_check_branch
      %18 = sbr.rel (0) target = $region9
    $region8: #{tpu_custom_call.1} parent=1 // pred_region
      _
    $region9: #{tpu_custom_call.1} parent=1 // pred_fallthru
      _
    // Predicated region
    $region10: #{tpu_custom_call.1} parent=1 // pred_check
      _
    $region11: #{tpu_custom_call.1} parent=1 // pred_check_branch
      %20 = sbr.rel (0) target = $region13
    $region12: #{tpu_custom_call.1} parent=1 // pred_region
      _
    $region13: #{tpu_custom_call.1} parent=1 // pred_fallthru
      _
    // Predicated region
    $region14: #{tpu_custom_call.1} parent=1 // pred_check
      _
    $region15: #{tpu_custom_call.1} parent=1 // pred_check_branch
      %22 = sbr.rel (0) target = $region17
    $region16: #{tpu_custom_call.1} parent=1 // pred_region
      _
    $region17: #{tpu_custom_call.1} parent=1 // pred_fallthru
      _
    // Predicated region
    $region18: #{tpu_custom_call.1} parent=1 // pred_check
      _
    $region19: #{tpu_custom_call.1} parent=1 // pred_check_branch
      %24 = sbr.rel (0) target = $region21
    $region20: #{tpu_custom_call.1} parent=1 // pred_region
      _
    $region21: #{tpu_custom_call.1} parent=1 // pred_fallthru
      _
    // Predicated region
    $region22: #{tpu_custom_call.1} parent=1 // pred_check
      _
    $region23: #{tpu_custom_call.1} parent=1 // pred_check_branch
      %26 = sbr.rel (0) target = $region25
    $region24: #{tpu_custom_call.1} parent=1 // pred_region
      _
    $region25: #{tpu_custom_call.1} parent=1 // pred_fallthru
      _
    // Predicated region
    $region26: #{tpu_custom_call.1} parent=1 // pred_check
      _
    $region27: #{tpu_custom_call.1} parent=1 // pred_check_branch
      %28 = sbr.rel (0) target = $region29
    $region28: #{tpu_custom_call.1} parent=1 // pred_region
      _
    $region29: #{tpu_custom_call.1} parent=1 // pred_fallthru
      _
    // Predicated region
    $region30: #{tpu_custom_call.1} parent=1 // pred_check
      _
    $region31: #{tpu_custom_call.1} parent=1 // pred_check_branch
      %30 = sbr.rel (0) target = $region33
    $region32: #{tpu_custom_call.1} parent=1 // pred_region
      _
    $region33: #{tpu_custom_call.1} parent=1 // pred_fallthru
      _
    // Predicated region
    $region34: #{tpu_custom_call.1} parent=1 // pred_check
      _
    $region35: #{tpu_custom_call.1} parent=1 // pred_check_branch
      %32 = sbr.rel (0) target = $region37
    $region36: #{tpu_custom_call.1} parent=1 // pred_region
      _
    $region37: #{tpu_custom_call.1} parent=1 // pred_fallthru
      _
    %v34 = vld [vmem:[%s0] sm:$0xff]
    %v35 = vld [vmem:[%s0 + $0x8] sm:$0xff]
    %v36 = vmul.f32 %v34, %v34
    %v37 = vmul.f32 %v35, %v35
    %vm38 = vcmask 261120
    %v39 = vsel %vm38, %v36, 0.0
    %40 = vadd.xlane.f32.xlu0 %v39
    %v41 = vpop.xlane.xlu0 %40
    %v42 = vsel %vm38, %v37, 0.0
    %43 = vadd.xlane.f32.xlu0 %v42
    %v44 = vpop.xlane.xlu0 %43
    %v45 = vrcp.pop 32.0
    %v46 = vmul.f32 32.0, %v45
    %v47 = vsub.f32 1.0, %v46
    %v48 = vmul.f32 %v45, %v47
    %v49 = vadd.f32 %v45, %v48
    %vm50 = vweird.f32 %v45
    %v51 = vsel %vm50, %v45, %v49
    %v52 = vmul.f32 %v41, %v51
    %v53 = vmul.f32 %v44, %v51
    %v54 = vadd.f32 %v52, 1.1920929e-07
    %v55 = vadd.f32 %v53, 1.1920929e-07
    %v56 = vrsqrt.pop %v54
    %v57 = vmul.f32 %v56, %v54
    %v58 = vmul.f32 %v57, %v56
    %v59 = vmul.f32 0.5, %v58
    %v60 = vsub.f32 1.5, %v59
    %v61 = vmul.f32 %v56, %v60
    %vm62 = vweird.f32 %v54
    %vm63 = vweird.f32 %v56
    %vm64 = vmor %vm62, %vm63
    %v65 = vsel %vm64, %v56, %v61
    %v66 = vrsqrt.pop %v55
    %v67 = vmul.f32 %v66, %v55
    %v68 = vmul.f32 %v67, %v66
    %v69 = vmul.f32 0.5, %v68
    %v70 = vsub.f32 1.5, %v69
    %v71 = vmul.f32 %v66, %v70
    %vm72 = vweird.f32 %v55
    %vm73 = vweird.f32 %v66
    %vm74 = vmor %vm72, %vm73
    %v75 = vsel %vm74, %v66, %v71
    %v76 = vmul.f32 %v34, %v65
    %v77 = vmul.f32 %v35, %v75
    %v78 = vpack.c.bf16 %v77, %v76
    %v79 = vld [vmem:[%s1] sm:$0xf]
    %v80 = vld [vmem:[%s1 + $0x4] sm:$0xf]
    %v81 = vld [vmem:[%s1 + $0x8] sm:$0xf]
    %v82 = vld [vmem:[%s1 + $0xc] sm:$0xf]
    %v83 = vld [vmem:[%s2] sm:$0x1]
    %v85 = vperm.slane %v83, 0
    %v91 = vunpack.c.l.b16 %v79
    %v92 = vunpack.c.l.b16 %v80
    %v93 = vunpack.c.l.b16 %v81
    %v94 = vunpack.c.l.b16 %v82
    %v95 = vpack.c.b16 %v92, %v91
    %v96 = vpack.c.b16 %v94, %v93
    %v100 = vsel %vm38, %v78, 0
    %102 = vmatpush.bf16.msra.mxu0 0
    %103 = vmatpush.bf16.msra.mxu0 0
    %104 = vmatpush.bf16.msra.mxu0 0
    %105 = vmatpush.bf16.msra.mxu0 0
    %106 = vmatpush.bf16.msra.mxu0 0
    %107 = vmatpush.bf16.msra.mxu0 0
    %108 = vmatpush.bf16.msra.mxu0 %v96
    %109 = vmatpush.bf16.msra.mxu0 %v95
    %110 = vmatmul.bf16.gmra.mxu0 %v100
    %v111 = vpop.f32.mrf.mxu0
    %v112 = vadd.f32 %v85, %v111
    %v113 = vpop.f32.mrf.mxu0
    %v114 = vadd.f32 %v85, %v113
    %115 = vdwg.mxu0
    %117 = vrot.lane.b32.xlu0 %v112, 120
    %v118 = vpop.permute.xlu0 %117
    %120 = vrot.lane.b32.xlu0 %v112, 112
    %v121 = vpop.permute.xlu0 %120
    %123 = vrot.lane.b32.xlu0 %v112, 104
    %v124 = vpop.permute.xlu0 %123
    %127 = vrot.lane.b32.xlu0 %v114, 120
    %v128 = vpop.permute.xlu0 %127
    %130 = vrot.lane.b32.xlu0 %v114, 112
    %v131 = vpop.permute.xlu0 %130
    %133 = vrot.lane.b32.xlu0 %v114, 104
    %v134 = vpop.permute.xlu0 %133
    %v136 = vpack.c.bf16 %v112, %v112
    %v137 = vpack.c.bf16 %v118, %v118
    %v138 = vpack.c.bf16 %v121, %v121
    %v139 = vpack.c.bf16 %v124, %v124
    %v140 = vpack.c.bf16 %v114, %v114
    %v141 = vpack.c.bf16 %v128, %v128
    %v142 = vpack.c.bf16 %v131, %v131
    %v143 = vpack.c.bf16 %v134, %v134
    %v145 = vunpack.c.l.b16 %v136
    %v146 = vpack.c.b16 %v145, %v145
    %147 = vrot.lane.b32.xlu0 %v146, 96
    %v148 = vpop.permute.xlu0 %147
    %vm149 = vcmask 64512
    %v151 = vsel %vm149, %v136, 0
    %v154 = vsel %vm149, %v148, 0
    %156 = vmatpush.bf16.xpose.msra.mxu0 0
    %157 = vmatpush.bf16.xpose.msra.mxu0 0
    %158 = vmatpush.bf16.xpose.msra.mxu0 0
    %159 = vmatpush.bf16.xpose.msra.mxu0 0
    %160 = vmatpush.bf16.xpose.msra.mxu0 0
    %161 = vmatpush.bf16.xpose.msra.mxu0 0
    %162 = vmatpush.bf16.xpose.msra.mxu0 0
    %163 = vmatpush.bf16.xpose.msra.mxu0 %v154
    %164 = vmatmul.bf16.gmra.mxu0 %v151
    %v165 = vpop.f32.mrf.mxu0
    %v166 = vadd.f32 0.0, %v165
    %v167 = vpop.f32.mrf.mxu0
    %168 = vdwg.mxu0
    %v170 = vunpack.c.l.b16 %v137
    %v171 = vpack.c.b16 %v170, %v170
    %172 = vrot.lane.b32.xlu0 %v171, 96
    %v173 = vpop.permute.xlu0 %172
    %v175 = vsel %vm149, %v137, 0
    %v178 = vsel %vm149, %v173, 0
    %180 = vmatpush.bf16.xpose.msra.mxu0 0
    %181 = vmatpush.bf16.xpose.msra.mxu0 0
    %182 = vmatpush.bf16.xpose.msra.mxu0 0
    %183 = vmatpush.bf16.xpose.msra.mxu0 0
    %184 = vmatpush.bf16.xpose.msra.mxu0 0
    %185 = vmatpush.bf16.xpose.msra.mxu0 0
    %186 = vmatpush.bf16.xpose.msra.mxu0 0
    %187 = vmatpush.bf16.xpose.msra.mxu0 %v178
    %188 = vmatmul.bf16.gmra.mxu0 %v175
    %v189 = vpop.f32.mrf.mxu0
    %v190 = vadd.f32 0.0, %v189
    %v191 = vpop.f32.mrf.mxu0
    %192 = vdwg.mxu0
    %v194 = vunpack.c.l.b16 %v138
    %v195 = vpack.c.b16 %v194, %v194
    %196 = vrot.lane.b32.xlu0 %v195, 96
    %v197 = vpop.permute.xlu0 %196
    %v199 = vsel %vm149, %v138, 0
    %v202 = vsel %vm149, %v197, 0
    %204 = vmatpush.bf16.xpose.msra.mxu0 0
    %205 = vmatpush.bf16.xpose.msra.mxu0 0
    %206 = vmatpush.bf16.xpose.msra.mxu0 0
    %207 = vmatpush.bf16.xpose.msra.mxu0 0
    %208 = vmatpush.bf16.xpose.msra.mxu0 0
    %209 = vmatpush.bf16.xpose.msra.mxu0 0
    %210 = vmatpush.bf16.xpose.msra.mxu0 0
    %211 = vmatpush.bf16.xpose.msra.mxu0 %v202
    %212 = vmatmul.bf16.gmra.mxu0 %v199
    %v213 = vpop.f32.mrf.mxu0
    %v214 = vadd.f32 0.0, %v213
    %v215 = vpop.f32.mrf.mxu0
    %216 = vdwg.mxu0
    %v218 = vunpack.c.l.b16 %v139
    %v219 = vpack.c.b16 %v218, %v218
    %220 = vrot.lane.b32.xlu0 %v219, 96
    %v221 = vpop.permute.xlu0 %220
    %v223 = vsel %vm149, %v139, 0
    %v226 = vsel %vm149, %v221, 0
    %228 = vmatpush.bf16.xpose.msra.mxu0 0
    %229 = vmatpush.bf16.xpose.msra.mxu0 0
    %230 = vmatpush.bf16.xpose.msra.mxu0 0
    %231 = vmatpush.bf16.xpose.msra.mxu0 0
    %232 = vmatpush.bf16.xpose.msra.mxu0 0
    %233 = vmatpush.bf16.xpose.msra.mxu0 0
    %234 = vmatpush.bf16.xpose.msra.mxu0 0
    %235 = vmatpush.bf16.xpose.msra.mxu0 %v226
    %236 = vmatmul.bf16.gmra.mxu0 %v223
    %v237 = vpop.f32.mrf.mxu0
    %v238 = vadd.f32 0.0, %v237
    %v239 = vpop.f32.mrf.mxu0
    %240 = vdwg.mxu0
    %v242 = vunpack.c.l.b16 %v140
    %v243 = vpack.c.b16 %v242, %v242
    %244 = vrot.lane.b32.xlu0 %v243, 96
    %v245 = vpop.permute.xlu0 %244
    %v247 = vsel %vm149, %v140, 0
    %v250 = vsel %vm149, %v245, 0
    %252 = vmatpush.bf16.xpose.msra.mxu0 0
    %253 = vmatpush.bf16.xpose.msra.mxu0 0
    %254 = vmatpush.bf16.xpose.msra.mxu0 0
    %255 = vmatpush.bf16.xpose.msra.mxu0 0
    %256 = vmatpush.bf16.xpose.msra.mxu0 0
    %257 = vmatpush.bf16.xpose.msra.mxu0 0
    %258 = vmatpush.bf16.xpose.msra.mxu0 0
    %259 = vmatpush.bf16.xpose.msra.mxu0 %v250
    %260 = vmatmul.bf16.gmra.mxu0 %v247
    %v261 = vpop.f32.mrf.mxu0
    %v262 = vadd.f32 0.0, %v261
    %v263 = vpop.f32.mrf.mxu0
    %264 = vdwg.mxu0
    %v266 = vunpack.c.l.b16 %v141
    %v267 = vpack.c.b16 %v266, %v266
    %268 = vrot.lane.b32.xlu0 %v267, 96
    %v269 = vpop.permute.xlu0 %268
    %v271 = vsel %vm149, %v141, 0
    %v274 = vsel %vm149, %v269, 0
    %276 = vmatpush.bf16.xpose.msra.mxu0 0
    %277 = vmatpush.bf16.xpose.msra.mxu0 0
    %278 = vmatpush.bf16.xpose.msra.mxu0 0
    %279 = vmatpush.bf16.xpose.msra.mxu0 0
    %280 = vmatpush.bf16.xpose.msra.mxu0 0
    %281 = vmatpush.bf16.xpose.msra.mxu0 0
    %282 = vmatpush.bf16.xpose.msra.mxu0 0
    %283 = vmatpush.bf16.xpose.msra.mxu0 %v274
    %284 = vmatmul.bf16.gmra.mxu0 %v271
    %v285 = vpop.f32.mrf.mxu0
    %v286 = vadd.f32 0.0, %v285
    %v287 = vpop.f32.mrf.mxu0
    %288 = vdwg.mxu0
    %v290 = vunpack.c.l.b16 %v142
    %v291 = vpack.c.b16 %v290, %v290
    %292 = vrot.lane.b32.xlu0 %v291, 96
    %v293 = vpop.permute.xlu0 %292
    %v295 = vsel %vm149, %v142, 0
    %v298 = vsel %vm149, %v293, 0
    %300 = vmatpush.bf16.xpose.msra.mxu0 0
    %301 = vmatpush.bf16.xpose.msra.mxu0 0
    %302 = vmatpush.bf16.xpose.msra.mxu0 0
    %303 = vmatpush.bf16.xpose.msra.mxu0 0
    %304 = vmatpush.bf16.xpose.msra.mxu0 0
    %305 = vmatpush.bf16.xpose.msra.mxu0 0
    %306 = vmatpush.bf16.xpose.msra.mxu0 0
    %307 = vmatpush.bf16.xpose.msra.mxu0 %v298
    %308 = vmatmul.bf16.gmra.mxu0 %v295
    %v309 = vpop.f32.mrf.mxu0
    %v310 = vadd.f32 0.0, %v309
    %v311 = vpop.f32.mrf.mxu0
    %312 = vdwg.mxu0
    %v314 = vunpack.c.l.b16 %v143
    %v315 = vpack.c.b16 %v314, %v314
    %316 = vrot.lane.b32.xlu0 %v315, 96
    %v317 = vpop.permute.xlu0 %316
    %v319 = vsel %vm149, %v143, 0
    %v322 = vsel %vm149, %v317, 0
    %324 = vmatpush.bf16.xpose.msra.mxu0 0
    %325 = vmatpush.bf16.xpose.msra.mxu0 0
    %326 = vmatpush.bf16.xpose.msra.mxu0 0
    %327 = vmatpush.bf16.xpose.msra.mxu0 0
    %328 = vmatpush.bf16.xpose.msra.mxu0 0
    %329 = vmatpush.bf16.xpose.msra.mxu0 0
    %330 = vmatpush.bf16.xpose.msra.mxu0 0
    %331 = vmatpush.bf16.xpose.msra.mxu0 %v322
    %332 = vmatmul.bf16.gmra.mxu0 %v319
    %v333 = vpop.f32.mrf.mxu0
    %v334 = vadd.f32 0.0, %v333
    %v335 = vpop.f32.mrf.mxu0
    %336 = vdwg.mxu0
    %v337 = vmul.f32 %v166, 0.35355338
    %v338 = vmul.f32 %v190, 0.35355338
    %v339 = vmul.f32 %v214, 0.35355338
    %v340 = vmul.f32 %v238, 0.35355338
    %v341 = vmul.f32 %v262, 0.35355338
    %v342 = vmul.f32 %v286, 0.35355338
    %v343 = vmul.f32 %v310, 0.35355338
    %v344 = vmul.f32 %v334, 0.35355338
    %v345 = vlaneseq
    %v346 = vshrl.u32 %v345, 7
    %v347 = vlaneseq
    %v348 = vand.u32 %v347, 127
    %vm349 = vcmp.ge.s32.totalorder %v346, %v348
    %v350 = vsel %vm349, 1, 0
    %vm351 = vcmp.eq.s32.totalorder %v350, 1
    %v352 = vsel %vm351, %v337, -1e+30
    %v353 = vsel %vm351, %v338, -1e+30
    %v354 = vsel %vm351, %v339, -1e+30
    %v355 = vsel %vm351, %v340, -1e+30
    %v356 = vsel %vm351, %v341, -1e+30
    %v357 = vsel %vm351, %v342, -1e+30
    %v358 = vsel %vm351, %v343, -1e+30
    %v359 = vsel %vm351, %v344, -1e+30
    %v360 = vsel %vm149, %v352, -inf
    %361 = vmax.xlane.f32.xlu0 %v360
    %v362 = vpop.xlane.xlu0 %361
    %v363 = vsel %vm149, %v353, -inf
    %364 = vmax.xlane.f32.xlu0 %v363
    %v365 = vpop.xlane.xlu0 %364
    %v366 = vsel %vm149, %v354, -inf
    %367 = vmax.xlane.f32.xlu0 %v366
    %v368 = vpop.xlane.xlu0 %367
    %v369 = vsel %vm149, %v355, -inf
    %370 = vmax.xlane.f32.xlu0 %v369
    %v371 = vpop.xlane.xlu0 %370
    %v372 = vsel %vm149, %v356, -inf
    %373 = vmax.xlane.f32.xlu0 %v372
    %v374 = vpop.xlane.xlu0 %373
    %v375 = vsel %vm149, %v357, -inf
    %376 = vmax.xlane.f32.xlu0 %v375
    %v377 = vpop.xlane.xlu0 %376
    %v378 = vsel %vm149, %v358, -inf
    %379 = vmax.xlane.f32.xlu0 %v378
    %v380 = vpop.xlane.xlu0 %379
    %v381 = vsel %vm149, %v359, -inf
    %382 = vmax.xlane.f32.xlu0 %v381
    %v383 = vpop.xlane.xlu0 %382
    %v384 = vsub.f32 %v352, %v362
    %v385 = vsub.f32 %v353, %v365
    %v386 = vsub.f32 %v354, %v368
    %v387 = vsub.f32 %v355, %v371
    %v388 = vsub.f32 %v356, %v374
    %v389 = vsub.f32 %v357, %v377
    %v390 = vsub.f32 %v358, %v380
    %v391 = vsub.f32 %v359, %v383
    %v392 = vmul.f32 %v384, 1.442695
    %v393 = vpow.pop %v392
    %v394 = vmul.f32 %v385, 1.442695
    %v395 = vpow.pop %v394
    %v396 = vmul.f32 %v386, 1.442695
    %v397 = vpow.pop %v396
    %v398 = vmul.f32 %v387, 1.442695
    %v399 = vpow.pop %v398
    %v400 = vmul.f32 %v388, 1.442695
    %v401 = vpow.pop %v400
    %v402 = vmul.f32 %v389, 1.442695
    %v403 = vpow.pop %v402
    %v404 = vmul.f32 %v390, 1.442695
    %v405 = vpow.pop %v404
    %v406 = vmul.f32 %v391, 1.442695
    %v407 = vpow.pop %v406
    %v408 = vsel %vm149, %v393, 0.0
    %409 = vadd.xlane.f32.xlu0 %v408
    %v410 = vpop.xlane.xlu0 %409
    %v411 = vsel %vm149, %v395, 0.0
    %412 = vadd.xlane.f32.xlu0 %v411
    %v413 = vpop.xlane.xlu0 %412
    %v414 = vsel %vm149, %v397, 0.0
    %415 = vadd.xlane.f32.xlu0 %v414
    %v416 = vpop.xlane.xlu0 %415
    %v417 = vsel %vm149, %v399, 0.0
    %418 = vadd.xlane.f32.xlu0 %v417
    %v419 = vpop.xlane.xlu0 %418
    %v420 = vsel %vm149, %v401, 0.0
    %421 = vadd.xlane.f32.xlu0 %v420
    %v422 = vpop.xlane.xlu0 %421
    %v423 = vsel %vm149, %v403, 0.0
    %424 = vadd.xlane.f32.xlu0 %v423
    %v425 = vpop.xlane.xlu0 %424
    %v426 = vsel %vm149, %v405, 0.0
    %427 = vadd.xlane.f32.xlu0 %v426
    %v428 = vpop.xlane.xlu0 %427
    %v429 = vsel %vm149, %v407, 0.0
    %430 = vadd.xlane.f32.xlu0 %v429
    %v431 = vpop.xlane.xlu0 %430
    %v432 = vrcp.pop %v410
    %v433 = vrcp.pop %v413
    %v434 = vrcp.pop %v416
    %v435 = vrcp.pop %v419
    %v436 = vrcp.pop %v422
    %v437 = vrcp.pop %v425
    %v438 = vrcp.pop %v428
    %v439 = vrcp.pop %v431
    %v440 = vmul.f32 %v393, %v432
    %v441 = vmul.f32 %v395, %v433
    %v442 = vmul.f32 %v397, %v434
    %v443 = vmul.f32 %v399, %v435
    %v444 = vmul.f32 %v401, %v436
    %v445 = vmul.f32 %v403, %v437
    %v446 = vmul.f32 %v405, %v438
    %v447 = vmul.f32 %v407, %v439
    %v448 = vpack.c.bf16 %v440, %v440
    %v449 = vpack.c.bf16 %v441, %v441
    %v450 = vpack.c.bf16 %v442, %v442
    %v451 = vpack.c.bf16 %v443, %v443
    %v452 = vpack.c.bf16 %v444, %v444
    %v453 = vpack.c.bf16 %v445, %v445
    %v454 = vpack.c.bf16 %v446, %v446
    %v455 = vpack.c.bf16 %v447, %v447
    %456 = vrot.lane.b32.xlu0 %v146, 64
    %v457 = vpop.permute.xlu0 %456
    %v459 = vsel %vm149, %v448, 0
    %vm461 = vcmask 1043456
    %v463 = vsel %vm461, %v457, 0
    %465 = vmatpush.bf16.msra.mxu0 0
    %466 = vmatpush.bf16.msra.mxu0 0
    %467 = vmatpush.bf16.msra.mxu0 0
    %468 = vmatpush.bf16.msra.mxu0 0
    %469 = vmatpush.bf16.msra.mxu0 0
    %470 = vmatpush.bf16.msra.mxu0 0
    %471 = vmatpush.bf16.msra.mxu0 0
    %472 = vmatpush.bf16.msra.mxu0 %v463
    %473 = vmatmul.bf16.gmra.mxu0 %v459
    %v474 = vpop.f32.mrf.mxu0
    %v475 = vadd.f32 0.0, %v474
    %v476 = vpop.f32.mrf.mxu0
    %477 = vdwg.mxu0
    %478 = vrot.lane.b32.xlu0 %v171, 64
    %v479 = vpop.permute.xlu0 %478
    %v481 = vsel %vm149, %v449, 0
    %v484 = vsel %vm461, %v479, 0
    %486 = vmatpush.bf16.msra.mxu0 0
    %487 = vmatpush.bf16.msra.mxu0 0
    %488 = vmatpush.bf16.msra.mxu0 0
    %489 = vmatpush.bf16.msra.mxu0 0
    %490 = vmatpush.bf16.msra.mxu0 0
    %491 = vmatpush.bf16.msra.mxu0 0
    %492 = vmatpush.bf16.msra.mxu0 0
    %493 = vmatpush.bf16.msra.mxu0 %v484
    %494 = vmatmul.bf16.gmra.mxu0 %v481
    %v495 = vpop.f32.mrf.mxu0
    %v496 = vadd.f32 0.0, %v495
    %v497 = vpop.f32.mrf.mxu0
    %498 = vdwg.mxu0
    %499 = vrot.lane.b32.xlu0 %v195, 64
    %v500 = vpop.permute.xlu0 %499
    %v502 = vsel %vm149, %v450, 0
    %v505 = vsel %vm461, %v500, 0
    %507 = vmatpush.bf16.msra.mxu0 0
    %508 = vmatpush.bf16.msra.mxu0 0
    %509 = vmatpush.bf16.msra.mxu0 0
    %510 = vmatpush.bf16.msra.mxu0 0
    %511 = vmatpush.bf16.msra.mxu0 0
    %512 = vmatpush.bf16.msra.mxu0 0
    %513 = vmatpush.bf16.msra.mxu0 0
    %514 = vmatpush.bf16.msra.mxu0 %v505
    %515 = vmatmul.bf16.gmra.mxu0 %v502
    %v516 = vpop.f32.mrf.mxu0
    %v517 = vadd.f32 0.0, %v516
    %v518 = vpop.f32.mrf.mxu0
    %519 = vdwg.mxu0
    %520 = vrot.lane.b32.xlu0 %v219, 64
    %v521 = vpop.permute.xlu0 %520
    %v523 = vsel %vm149, %v451, 0
    %v526 = vsel %vm461, %v521, 0
    %528 = vmatpush.bf16.msra.mxu0 0
    %529 = vmatpush.bf16.msra.mxu0 0
    %530 = vmatpush.bf16.msra.mxu0 0
    %531 = vmatpush.bf16.msra.mxu0 0
    %532 = vmatpush.bf16.msra.mxu0 0
    %533 = vmatpush.bf16.msra.mxu0 0
    %534 = vmatpush.bf16.msra.mxu0 0
    %535 = vmatpush.bf16.msra.mxu0 %v526
    %536 = vmatmul.bf16.gmra.mxu0 %v523
    %v537 = vpop.f32.mrf.mxu0
    %v538 = vadd.f32 0.0, %v537
    %v539 = vpop.f32.mrf.mxu0
    %540 = vdwg.mxu0
    %541 = vrot.lane.b32.xlu0 %v243, 64
    %v542 = vpop.permute.xlu0 %541
    %v544 = vsel %vm149, %v452, 0
    %v547 = vsel %vm461, %v542, 0
    %549 = vmatpush.bf16.msra.mxu0 0
    %550 = vmatpush.bf16.msra.mxu0 0
    %551 = vmatpush.bf16.msra.mxu0 0
    %552 = vmatpush.bf16.msra.mxu0 0
    %553 = vmatpush.bf16.msra.mxu0 0
    %554 = vmatpush.bf16.msra.mxu0 0
    %555 = vmatpush.bf16.msra.mxu0 0
    %556 = vmatpush.bf16.msra.mxu0 %v547
    %557 = vmatmul.bf16.gmra.mxu0 %v544
    %v558 = vpop.f32.mrf.mxu0
    %v559 = vadd.f32 0.0, %v558
    %v560 = vpop.f32.mrf.mxu0
    %561 = vdwg.mxu0
    %562 = vrot.lane.b32.xlu0 %v267, 64
    %v563 = vpop.permute.xlu0 %562
    %v565 = vsel %vm149, %v453, 0
    %v568 = vsel %vm461, %v563, 0
    %570 = vmatpush.bf16.msra.mxu0 0
    %571 = vmatpush.bf16.msra.mxu0 0
    %572 = vmatpush.bf16.msra.mxu0 0
    %573 = vmatpush.bf16.msra.mxu0 0
    %574 = vmatpush.bf16.msra.mxu0 0
    %575 = vmatpush.bf16.msra.mxu0 0
    %576 = vmatpush.bf16.msra.mxu0 0
    %577 = vmatpush.bf16.msra.mxu0 %v568
    %578 = vmatmul.bf16.gmra.mxu0 %v565
    %v579 = vpop.f32.mrf.mxu0
    %v580 = vadd.f32 0.0, %v579
    %v581 = vpop.f32.mrf.mxu0
    %582 = vdwg.mxu0
    %583 = vrot.lane.b32.xlu0 %v291, 64
    %v584 = vpop.permute.xlu0 %583
    %v586 = vsel %vm149, %v454, 0
    %v589 = vsel %vm461, %v584, 0
    %591 = vmatpush.bf16.msra.mxu0 0
    %592 = vmatpush.bf16.msra.mxu0 0
    %593 = vmatpush.bf16.msra.mxu0 0
    %594 = vmatpush.bf16.msra.mxu0 0
    %595 = vmatpush.bf16.msra.mxu0 0
    %596 = vmatpush.bf16.msra.mxu0 0
    %597 = vmatpush.bf16.msra.mxu0 0
    %598 = vmatpush.bf16.msra.mxu0 %v589
    %599 = vmatmul.bf16.gmra.mxu0 %v586
    %v600 = vpop.f32.mrf.mxu0
    %v601 = vadd.f32 0.0, %v600
    %v602 = vpop.f32.mrf.mxu0
    %603 = vdwg.mxu0
    %604 = vrot.lane.b32.xlu0 %v315, 64
    %v605 = vpop.permute.xlu0 %604
    %v607 = vsel %vm149, %v455, 0
    %v610 = vsel %vm461, %v605, 0
    %612 = vmatpush.bf16.msra.mxu0 0
    %613 = vmatpush.bf16.msra.mxu0 0
    %614 = vmatpush.bf16.msra.mxu0 0
    %615 = vmatpush.bf16.msra.mxu0 0
    %616 = vmatpush.bf16.msra.mxu0 0
    %617 = vmatpush.bf16.msra.mxu0 0
    %618 = vmatpush.bf16.msra.mxu0 0
    %619 = vmatpush.bf16.msra.mxu0 %v610
    %620 = vmatmul.bf16.gmra.mxu0 %v607
    %v621 = vpop.f32.mrf.mxu0
    %v622 = vadd.f32 0.0, %v621
    %v623 = vpop.f32.mrf.mxu0
    %624 = vdwg.mxu0
    %626 = vrot.lane.b32.xlu0 %v496, 8
    %v627 = vpop.permute.xlu0 %626
    %630 = vrot.lane.b32.xlu0 %v517, 16
    %v631 = vpop.permute.xlu0 %630
    %634 = vrot.lane.b32.xlu0 %v538, 24
    %v635 = vpop.permute.xlu0 %634
    %v637 = vsel %vm149, %v475, %v627
    %vm638 = vcmask 130048
    %v639 = vsel %vm638, %v637, %v631
    %vm640 = vcmask 195584
    %v641 = vsel %vm640, %v639, %v635
    %643 = vrot.lane.b32.xlu0 %v580, 8
    %v644 = vpop.permute.xlu0 %643
    %647 = vrot.lane.b32.xlu0 %v601, 16
    %v648 = vpop.permute.xlu0 %647
    %651 = vrot.lane.b32.xlu0 %v622, 24
    %v652 = vpop.permute.xlu0 %651
    %v654 = vsel %vm149, %v559, %v644
    %v655 = vsel %vm638, %v654, %v648
    %v656 = vsel %vm640, %v655, %v652
    %v657 = vpack.c.bf16 %v656, %v641
    %v658 = vld [vmem:[%s3] sm:$0xf]
    %v659 = vld [vmem:[%s3 + $0x4] sm:$0xf]
    %v660 = vld [vmem:[%s3 + $0x8] sm:$0xf]
    %v661 = vld [vmem:[%s3 + $0xc] sm:$0xf]
    %v662 = vld [vmem:[%s4] sm:$0x1]
    %v664 = vperm.slane %v662, 0
    %v670 = vunpack.c.l.b16 %v658
    %v671 = vunpack.c.l.b16 %v659
    %v672 = vunpack.c.l.b16 %v660
    %v673 = vunpack.c.l.b16 %v661
    %v674 = vpack.c.b16 %v671, %v670
    %v675 = vpack.c.b16 %v673, %v672
    %v679 = vsel %vm38, %v657, 0
    %681 = vmatpush.bf16.msra.mxu0 0
    %682 = vmatpush.bf16.msra.mxu0 0
    %683 = vmatpush.bf16.msra.mxu0 0
    %684 = vmatpush.bf16.msra.mxu0 0
    %685 = vmatpush.bf16.msra.mxu0 0
    %686 = vmatpush.bf16.msra.mxu0 0
    %687 = vmatpush.bf16.msra.mxu0 %v675
    %688 = vmatpush.bf16.msra.mxu0 %v674
    %689 = vmatmul.bf16.gmra.mxu0 %v679
    %v690 = vpop.f32.mrf.mxu0
    %v691 = vadd.f32 %v664, %v690
    %v692 = vpop.f32.mrf.mxu0
    %v693 = vadd.f32 %v664, %v692
    %694 = vdwg.mxu0
    %v695 = vadd.f32 %v34, %v691
    %v696 = vadd.f32 %v35, %v693
    %v697 = vmul.f32 %v695, %v695
    %v698 = vmul.f32 %v696, %v696
    %v699 = vsel %vm38, %v697, 0.0
    %700 = vadd.xlane.f32.xlu0 %v699
    %v701 = vpop.xlane.xlu0 %700
    %v702 = vsel %vm38, %v698, 0.0
    %703 = vadd.xlane.f32.xlu0 %v702
    %v704 = vpop.xlane.xlu0 %703
    %v705 = vmul.f32 %v701, %v51
    %v706 = vmul.f32 %v704, %v51
    %v707 = vadd.f32 %v705, 1.1920929e-07
    %v708 = vadd.f32 %v706, 1.1920929e-07
    %v709 = vrsqrt.pop %v707
    %v710 = vmul.f32 %v709, %v707
    %v711 = vmul.f32 %v710, %v709
    %v712 = vmul.f32 0.5, %v711
    %v713 = vsub.f32 1.5, %v712
    %v714 = vmul.f32 %v709, %v713
    %vm715 = vweird.f32 %v707
    %vm716 = vweird.f32 %v709
    %vm717 = vmor %vm715, %vm716
    %v718 = vsel %vm717, %v709, %v714
    %v719 = vrsqrt.pop %v708
    %v720 = vmul.f32 %v719, %v708
    %v721 = vmul.f32 %v720, %v719
    %v722 = vmul.f32 0.5, %v721
    %v723 = vsub.f32 1.5, %v722
    %v724 = vmul.f32 %v719, %v723
    %vm725 = vweird.f32 %v708
    %vm726 = vweird.f32 %v719
    %vm727 = vmor %vm725, %vm726
    %v728 = vsel %vm727, %v719, %v724
    %v729 = vmul.f32 %v695, %v718
    %v730 = vmul.f32 %v696, %v728
    %v731 = vpack.c.bf16 %v730, %v729
    %v732 = vld [vmem:[%s5] sm:$0xf]
    %v733 = vld [vmem:[%s5 + $0x4] sm:$0xf]
    %v734 = vld [vmem:[%s5 + $0x8] sm:$0xf]
    %v735 = vld [vmem:[%s5 + $0xc] sm:$0xf]
    %v736 = vld [vmem:[%s6] sm:$0x1]
    %v738 = vperm.slane %v736, 0
    %v744 = vunpack.c.l.b16 %v732
    %v745 = vunpack.c.l.b16 %v733
    %v746 = vunpack.c.l.b16 %v734
    %v747 = vunpack.c.l.b16 %v735
    %v748 = vpack.c.b16 %v745, %v744
    %v749 = vpack.c.b16 %v747, %v746
    %v753 = vsel %vm38, %v731, 0
    %755 = vmatpush.bf16.msra.mxu0 0
    %756 = vmatpush.bf16.msra.mxu0 0
    %757 = vmatpush.bf16.msra.mxu0 0
    %758 = vmatpush.bf16.msra.mxu0 0
    %759 = vmatpush.bf16.msra.mxu0 0
    %760 = vmatpush.bf16.msra.mxu0 0
    %761 = vmatpush.bf16.msra.mxu0 %v749
    %762 = vmatpush.bf16.msra.mxu0 %v748
    %763 = vmatmul.bf16.gmra.mxu0 %v753
    %v764 = vpop.f32.mrf.mxu0
    %v765 = vadd.f32 %v738, %v764
    %v766 = vpop.f32.mrf.mxu0
    %v767 = vadd.f32 %v738, %v766
    %768 = vdwg.mxu0
    %v769 = vmul.f32 %v765, 0.5
    %v770 = vmul.f32 %v767, 0.5
    %v771 = vmul.f32 %v765, 0.044715
    %v772 = vmul.f32 %v767, 0.044715
    %v773 = vmul.f32 %v771, %v765
    %v774 = vmul.f32 %v772, %v767
    %v775 = vmul.f32 %v773, %v765
    %v776 = vmul.f32 %v774, %v767
    %v777 = vadd.f32 %v765, %v775
    %v778 = vadd.f32 %v767, %v776
    %v779 = vmul.f32 %v777, 0.7978846
    %v780 = vmul.f32 %v778, 0.7978846
    %v781 = vtanh.pop %v779
    %v782 = vtanh.pop %v780
    %v783 = vadd.f32 %v781, 1.0
    %v784 = vadd.f32 %v782, 1.0
    %v785 = vmul.f32 %v769, %v783
    %v786 = vmul.f32 %v770, %v784
    %v787 = vpack.c.bf16 %v786, %v785
    %v788 = vld [vmem:[%s7] sm:$0xf]
    %v789 = vld [vmem:[%s7 + $0x4] sm:$0xf]
    %v790 = vld [vmem:[%s7 + $0x8] sm:$0xf]
    %v791 = vld [vmem:[%s7 + $0xc] sm:$0xf]
    %v792 = vld [vmem:[%s7 + $0x10] sm:$0xf]
    %v793 = vld [vmem:[%s7 + $0x14] sm:$0xf]
    %v794 = vld [vmem:[%s7 + $0x18] sm:$0xf]
    %v795 = vld [vmem:[%s7 + $0x1c] sm:$0xf]
    %v796 = vld [vmem:[%s7 + $0x20] sm:$0xf]
    %v797 = vld [vmem:[%s7 + $0x24] sm:$0xf]
    %v798 = vld [vmem:[%s7 + $0x28] sm:$0xf]
    %v799 = vld [vmem:[%s7 + $0x2c] sm:$0xf]
    %v800 = vld [vmem:[%s7 + $0x30] sm:$0xf]
    %v801 = vld [vmem:[%s7 + $0x34] sm:$0xf]
    %v802 = vld [vmem:[%s7 + $0x38] sm:$0xf]
    %v803 = vld [vmem:[%s7 + $0x3c] sm:$0xf]
    %v804 = vld [vmem:[%s8] sm:$0x1]
    %v806 = vperm.slane %v804, 0
    %v824 = vunpack.c.l.b16 %v788
    %v825 = vunpack.c.l.b16 %v789
    %v826 = vunpack.c.l.b16 %v790
    %v827 = vunpack.c.l.b16 %v791
    %v828 = vunpack.c.l.b16 %v792
    %v829 = vunpack.c.l.b16 %v793
    %v830 = vunpack.c.l.b16 %v794
    %v831 = vunpack.c.l.b16 %v795
    %v832 = vunpack.c.l.b16 %v796
    %v833 = vunpack.c.l.b16 %v797
    %v834 = vunpack.c.l.b16 %v798
    %v835 = vunpack.c.l.b16 %v799
    %v836 = vunpack.c.l.b16 %v800
    %v837 = vunpack.c.l.b16 %v801
    %v838 = vunpack.c.l.b16 %v802
    %v839 = vunpack.c.l.b16 %v803
    %v840 = vpack.c.b16 %v825, %v824
    %v841 = vpack.c.b16 %v827, %v826
    %v842 = vpack.c.b16 %v829, %v828
    %v843 = vpack.c.b16 %v831, %v830
    %v844 = vpack.c.b16 %v833, %v832
    %v845 = vpack.c.b16 %v835, %v834
    %v846 = vpack.c.b16 %v837, %v836
    %v847 = vpack.c.b16 %v839, %v838
    %856 = vmatpush.bf16.msra.mxu0 %v847
    %857 = vmatpush.bf16.msra.mxu0 %v846
    %858 = vmatpush.bf16.msra.mxu0 %v845
    %859 = vmatpush.bf16.msra.mxu0 %v844
    %860 = vmatpush.bf16.msra.mxu0 %v843
    %861 = vmatpush.bf16.msra.mxu0 %v842
    %862 = vmatpush.bf16.msra.mxu0 %v841
    %863 = vmatpush.bf16.msra.mxu0 %v840
    %864 = vmatmul.bf16.gmra.mxu0 %v787
    %v865 = vpop.f32.mrf.mxu0
    %v866 = vadd.f32 %v806, %v865
    %v867 = vpop.f32.mrf.mxu0
    %v868 = vadd.f32 %v806, %v867
    %869 = vdwg.mxu0
    %v870 = vadd.f32 %v695, %v866
    %v871 = vadd.f32 %v696, %v868
    %872 = vst.msk [vmem:[#allocation2] sm:$0xff] %vm38, %v870
    %873 = vst.msk [vmem:[#allocation2 + $0x8] sm:$0xff] %vm38, %v871
    // Predicated region
    $region38: #{tpu_custom_call.1} parent=1 // pred_check
      _
    $region39: #{tpu_custom_call.1} parent=1 // pred_check_branch
      %875 = sbr.rel (0) target = $region41
    $region40: #{tpu_custom_call.1} parent=1 // pred_region
      %877 = vsyncadd [#allocation3], 0
      %s878 = sshll.u32 [#allocation2], 4
      %s879 = int_to_ptr.vmem [resolvable:$true] %s878
      %s880 = sshll.u32 %s9, 4
      %s881 = int_to_ptr.hbm [resolvable:$true] %s880
      %886 = dma.vmem_to_hbm [thread:$0]  %s879, 256, %s881, [#allocation3], 128, 128, 8
    $region41: #{tpu_custom_call.1} parent=1 // pred_fallthru
      _
    // Predicated region
    $region42: #{tpu_custom_call.1} parent=1 // pred_check
      _
    $region43: #{tpu_custom_call.1} parent=1 // pred_check_branch
      %888 = sbr.rel (0) target = $region45
    $region44: #{tpu_custom_call.1} parent=1 // pred_region
      %890 = dma.done [#allocation3], 256
    $region45: #{tpu_custom_call.1} parent=1 // pred_fallthru
      _
    %891 = vsyncpa [#allocation3], 1

</llo_original>
